<compile_context>
chip_gen: v5e
topology: v5e:2x2
jax: 0.10.0
libtpu: 0.0.40
codegen_flags: <defaults>
</compile_context>

<pallas_src>
import functools
import math

import jax
import jax.numpy as jnp
import numpy as np
from jax.experimental import pallas as pl
from jax.experimental.pallas import tpu as pltpu

_MIB = 1024 * 1024


# --------------------------------------------------------------------------- #
# Kernels
# --------------------------------------------------------------------------- #
def _scale_kernel(x_ref, o_ref, *, scale):
    # Elementwise x * sqrt(d_model) on one (tR, W) lane-dense tile.
    # Multiply in f32 for parity with the PyTorch module (f32 xscale) even when
    # the activations are bf16; the cast cost is hidden under the memory bound.
    o_ref[...] = (x_ref[...].astype(jnp.float32) * scale).astype(o_ref.dtype)


def _pos_emb_kernel(inv_freq_ref, phase_ref, o_ref, *, size):
    # One (1, tL, D) tile of the relative positional embedding, closed form:
    #   pos_emb[0, j, 2k]   = sin(r * w_k)
    #   pos_emb[0, j, 2k+1] = cos(r * w_k) = sin(r * w_k + pi/2)
    # with r = (size - 1) - j.  inv_freq / phase are VMEM-resident (1,1,D)
    # inputs (constant index_map), so per-tile work is one mul-add + one sin.
    _, tL, _ = o_ref.shape           # static block shape, even for ragged tail
    row0 = pl.program_id(0) * tL
    j = row0 + jax.lax.broadcasted_iota(jnp.int32, (1, tL, 1), 1)
    r = (size - 1 - j).astype(jnp.float32)            # relative position
    angle = r * inv_freq_ref[...] + phase_ref[...]    # broadcast -> (1, tL, D)
    o_ref[...] = jnp.sin(angle).astype(o_ref.dtype)   # single sin pass


# --------------------------------------------------------------------------- #
# Tiling helpers
# --------------------------------------------------------------------------- #
def _pick_row_tile(n_rows, row_bytes, *, budget_bytes=1 * _MIB, min_steps=4):
    """Row tile (second-minor dim): ~budget_bytes per block, multiple of the
    8-row sublane quantum (or the full dim, which is always legal), capped so
    the grid has >= min_steps steps whenever there is enough work."""
    if n_rows <= 8:
        return n_rows
    t = max(8, (budget_bytes // max(row_bytes, 1)) // 8 * 8)
    steps_cap = (n_rows // min_steps) // 8 * 8
    if steps_cap >= 8:
        t = min(t, steps_cap)
    return min(t, n_rows)


def _vmem_limit(pipeline_footprint_bytes):
    """Explicit scoped-VMEM limit: generous headroom over the double-buffered
    pipeline footprint, but well under every generation's physical VMEM
    (v5e/v6e 128 MiB, v7x 64 MiB per TensorCore)."""
    return int(min(64 * _MIB, max(16 * _MIB, 2 * pipeline_footprint_bytes)))


def _lane_dense_2d(x):
    """Reshape x to a lane-dense 2D slab (rows, W) with W a multiple of 128 if
    the total element count allows (elementwise op => layout agnostic).  Falls
    back to (B*T, D) otherwise."""
    total = x.size
    for w in (1024, 512, 256, 128):
        if total % w == 0:
            return x.reshape(total // w, w)
    return x.reshape(-1, x.shape[-1])


# --------------------------------------------------------------------------- #
# Forward
# --------------------------------------------------------------------------- #
def espnet_rel_positional_encoding(x, d_model, dropout_rate=0.0, max_len=5000,
                                   *, block_budget_bytes=1 * _MIB):
    """Pallas implementation of EspnetRelPositionalEncoding.forward (eval)."""
    B, T, D = x.shape
    assert D == d_model, "d_model must match the feature dim of x"
    assert d_model % 2 == 0, "even d_model assumed (as in the PyTorch module)"
    assert T <= max_len, "extend_pe guarantees max_len >= T"
    xscale = math.sqrt(d_model)
    itemsize = x.dtype.itemsize

    # ---- x * sqrt(d_model): flattened lane-dense elementwise pass -----------
    x2d = _lane_dense_2d(x)
    rows, width = x2d.shape
    tR = _pick_row_tile(rows, width * itemsize, budget_bytes=block_budget_bytes,
                        min_steps=4)
    # pipeline footprint: 2 arrays (in + out) x 2 buffers x one block
    scale_footprint = 2 * 2 * tR * width * itemsize
    scaled2d = pl.pallas_call(
        functools.partial(_scale_kernel, scale=xscale),
        out_shape=jax.ShapeDtypeStruct((rows, width), x.dtype),
        grid=(pl.cdiv(rows, tR),),
        in_specs=[pl.BlockSpec((tR, width), lambda i: (i, 0))],
        out_specs=pl.BlockSpec((tR, width), lambda i: (i, 0)),
        compiler_params=pltpu.CompilerParams(
            dimension_semantics=("parallel",),
            vmem_limit_bytes=_vmem_limit(scale_footprint)),
    )(x2d)
    scaled = scaled2d.reshape(B, T, D)

    # ---- pos_emb = pe[:, center - T + 1 : center + T], closed form ----------
    L = 2 * T - 1
    # Host-precomputed feature-axis factors, kept VMEM-resident across grid
    # steps via a constant index_map (removes the per-tile iota/exp preamble).
    d_idx = np.arange(D)
    inv_freq = jnp.asarray(
        np.exp(((d_idx // 2) * 2).astype(np.float32)
               * (-math.log(10000.0) / d_model)).reshape(1, 1, D))
    phase = jnp.asarray(
        ((d_idx % 2).astype(np.float32) * (math.pi / 2.0)).reshape(1, 1, D))

    tL = _pick_row_tile(L, D * itemsize, budget_bytes=block_budget_bytes,
                        min_steps=4)
    pe_footprint = 2 * tL * D * itemsize + 2 * 2 * D * 4  # out dbl-buf + factors
    pos_emb = pl.pallas_call(
        functools.partial(_pos_emb_kernel, size=T),
        out_shape=jax.ShapeDtypeStruct((1, L, D), x.dtype),
        grid=(pl.cdiv(L, tL),),
        in_specs=[pl.BlockSpec((1, 1, D), lambda i: (0, 0, 0)),
                  pl.BlockSpec((1, 1, D), lambda i: (0, 0, 0))],
        out_specs=pl.BlockSpec((1, tL, D), lambda i: (0, i, 0)),
        compiler_params=pltpu.CompilerParams(
            dimension_semantics=("parallel",),
            vmem_limit_bytes=_vmem_limit(pe_footprint)),
    )(inv_freq, phase)

    # dropout(p=dropout_rate) is identity in eval mode.
    return scaled, pos_emb


# --------------------------------------------------------------------------- #
# Pure-JAX reference (transliteration of the PyTorch module, eval mode)
# --------------------------------------------------------------------------- #
def _reference(x, d_model, max_len):
    T = x.shape[1]
    position = jnp.arange(max_len, dtype=jnp.float32)[:, None]
    div_term = jnp.exp(
        jnp.arange(0, d_model, 2, dtype=jnp.float32)
        * -(math.log(10000.0) / d_model))
    pe_pos = jnp.zeros((max_len, d_model), jnp.float32)
    pe_pos = pe_pos.at[:, 0::2].set(jnp.sin(position * div_term))
    pe_pos = pe_pos.at[:, 1::2].set(jnp.cos(position * div_term))
    pe_neg = jnp.zeros((max_len, d_model), jnp.float32)
    pe_neg = pe_neg.at[:, 0::2].set(jnp.sin(-position * div_term))
    pe_neg = pe_neg.at[:, 1::2].set(jnp.cos(-position * div_term))
    pe_pos = jnp.flip(pe_pos, 0)[None]
    pe_neg = pe_neg[1:][None]
    pe = jnp.concatenate([pe_pos, pe_neg], axis=1)
    center = pe.shape[1] // 2
    return x * math.sqrt(d_model), pe[:, center - T + 1: center + T]


if __name__ == "__main__":
    max_len = 64
    dropout_rate = 0.1        # identity at eval time

    # Small default shapes.
    B, T, D = 2, 8, 32        # batch, time, d_model
    x = jax.random.normal(jax.random.PRNGKey(0), (B, T, D), dtype=jnp.float32)
    out_x, out_pe = espnet_rel_positional_encoding(
        x, d_model=D, dropout_rate=dropout_rate, max_len=max_len)
    jax.block_until_ready(out_x)
    jax.block_until_ready(out_pe)
    ref_x, ref_pe = _reference(x, D, max_len)
    assert out_x.shape == (B, T, D)
    assert out_pe.shape == (1, 2 * T - 1, D)
    assert jnp.allclose(out_x, ref_x, atol=1e-5, rtol=1e-5)
    assert jnp.allclose(out_pe, ref_pe, atol=1e-5, rtol=1e-5)

    # Exercise ragged tiles on the pos_emb grid (L = 79 odd, multi-step grid).
    T2 = 40
    x2 = jax.random.normal(jax.random.PRNGKey(1), (B, T2, D), dtype=jnp.float32)
    out_x2, out_pe2 = espnet_rel_positional_encoding(
        x2, d_model=D, dropout_rate=dropout_rate, max_len=max_len)
    jax.block_until_ready(out_x2)
    jax.block_until_ready(out_pe2)
    ref_x2, ref_pe2 = _reference(x2, D, max_len)
    assert jnp.allclose(out_x2, ref_x2, atol=1e-5, rtol=1e-5)
    assert jnp.allclose(out_pe2, ref_pe2, atol=1e-4, rtol=1e-4)

    # Exercise multi-step + ragged tiling on the flattened scale pass too
    # (tiny byte budget forces rows > tile; D=32 exercises the lane-dense
    # reshape path for D % 128 != 0).
    T3 = 36
    x3 = jax.random.normal(jax.random.PRNGKey(2), (B, T3, D), dtype=jnp.float32)
    out_x3, out_pe3 = espnet_rel_positional_encoding(
        x3, d_model=D, dropout_rate=dropout_rate, max_len=max_len,
        block_budget_bytes=4096)
    jax.block_until_ready(out_x3)
    jax.block_until_ready(out_pe3)
    ref_x3, ref_pe3 = _reference(x3, D, max_len)
    assert jnp.allclose(out_x3, ref_x3, atol=1e-5, rtol=1e-5)
    assert jnp.allclose(out_pe3, ref_pe3, atol=1e-4, rtol=1e-4)

    print("KERNEL_OK")
</pallas_src>

<mosaic_0001>
module attributes {stable_mosaic.version = 11 : i64} {
  func.func @_scale_kernel(%arg0: i32, %arg1: memref<1x512xf32, #tpu.memory_space<vmem>>, %arg2: memref<1x512xf32, #tpu.memory_space<vmem>>) attributes {dimension_semantics = [#tpu.dimension_semantics<parallel>], iteration_bounds = array<i64: 1>, scalar_prefetch = 0 : i64, scratch_operands = 0 : i64, tpu.core_type = #tpu.core_type<tc>, window_params = [{transform_indices = @transform_0, window_bounds = array<i64: 1, 512>}, {transform_indices = @transform_1, window_bounds = array<i64: 1, 512>}]} {
    %c0 = arith.constant 0 : index
    %c0_0 = arith.constant 0 : index
    %0 = vector.load %arg1[%c0, %c0_0] : memref<1x512xf32, #tpu.memory_space<vmem>>, vector<1x512xf32>
    %cst = arith.constant 5.65685415 : f32
    %1 = vector.broadcast %cst : f32 to vector<1x512xf32>
    %2 = arith.mulf %0, %1 : vector<1x512xf32>
    %c0_1 = arith.constant 0 : index
    %c0_2 = arith.constant 0 : index
    %3 = vector.load %arg2[%c0_1, %c0_2] : memref<1x512xf32, #tpu.memory_space<vmem>>, vector<1x512xf32>
    tpu.vector_store %arg2[%c0_1, %c0_2], %2 {strides = array<i32>} : memref<1x512xf32, #tpu.memory_space<vmem>>, vector<1x512xf32>,
    return
  }
  func.func @transform_0(%arg0: i32) -> (i32, i32) {
    %c0_i32 = arith.constant 0 : i32
    %c0_i32_0 = arith.constant 0 : i32
    return %arg0, %c0_i32 : i32, i32
  }
  func.func @transform_1(%arg0: i32) -> (i32, i32) {
    %c0_i32 = arith.constant 0 : i32
    %c0_i32_0 = arith.constant 0 : i32
    return %arg0, %c0_i32 : i32, i32
  }
}

</mosaic_0001>

<llo_original>
// kernel: tpu_custom_call.1
$region0: #{tpu_custom_call.1}
  #allocation0 [shape = 'u32[]', space=smem, size = 0x4, offset = 0x4, fixed_abs, tag = 'smem constant byte address 0x4 - core index']
  #allocation1 [shape = 'u32[72,128]{1,0:T(1,128)}', space=vmem, size = 0x9000, scoped, tag = 'internal scratch']
  %s0 = inlined_call_operand.hbm [shape: f32[1,512], index: 0, kind: input, shape index: {}]
  %s1 = inlined_call_operand.hbm [shape: f32[1,512], index: 1, kind: output, shape index: {}]
  %s2 = sld [smem:[#allocation0]]
  $region18: #{tpu_custom_call.1} parent=0
    _
  %s4 = ssub.s32 1, %s2
  %s5 = scalar_select 0, %s4, %s2
  $region1: #{tpu_custom_call.1} parent=0
    #allocation2 [shape = 'u8[2048]{0}', space=vmem, size = 0x800, scoped, tag = 'input window, operand 0, single buffered']
    #allocation3 [shape = 's32[1]{0}', space=sflag, size = 0x4, scoped, tag = 'scoped memory for tpu_custom_call.1']
    #allocation4 [shape = 's32[1]{0}', space=sflag, size = 0x4, scoped, tag = 'scoped memory for tpu_custom_call.1']
    #allocation5 [shape = 'u8[2048]{0}', space=vmem, size = 0x800, scoped, tag = 'output window, operand 0, single buffered']
    %6 = vsyncpa [#allocation3], 0
    %7 = vsyncpa [#allocation4], 0
    // Predicated region
    $region2: #{tpu_custom_call.1} parent=1 // pred_check
      _
    $region3: #{tpu_custom_call.1} parent=1 // pred_check_branch
      %9 = sbr.rel (0) target = $region5
    $region4: #{tpu_custom_call.1} parent=1 // pred_region
      %11 = vsyncadd [#allocation3], 0
      %s13 = sshll.u32 %s0, 4
      %s14 = int_to_ptr.hbm [resolvable:$true] %s13
      %s15 = sshll.u32 [#allocation2], 4
      %s16 = int_to_ptr.vmem [resolvable:$true] %s15
      %18 = dma.hbm_to_vmem [thread:$0]  %s14, 64, %s16, [#allocation3]
    $region5: #{tpu_custom_call.1} parent=1 // pred_fallthru
      _
    // Predicated region
    $region6: #{tpu_custom_call.1} parent=1 // pred_check
      _
    $region7: #{tpu_custom_call.1} parent=1 // pred_check_branch
      %20 = sbr.rel (0) target = $region9
    $region8: #{tpu_custom_call.1} parent=1 // pred_region
      %22 = dma.done [#allocation3], 64
    $region9: #{tpu_custom_call.1} parent=1 // pred_fallthru
      _
    %v23 = vld [vmem:[#allocation2] sm:$0xf]
    %v24 = vmul.f32 %v23, 5.656854
    %v25 = vlaneseq
    %vm26 = vcmp.ge.s32.totalorder %v25, 0
    %vm27 = vcmp.lt.s32.totalorder %v25, 512
    %vm28 = vmand %vm26, %vm27
    %29 = vst.msk [vmem:[#allocation5] sm:$0xf] %vm28, %v24
    // Predicated region
    $region10: #{tpu_custom_call.1} parent=1 // pred_check
      _
    $region11: #{tpu_custom_call.1} parent=1 // pred_check_branch
      %31 = sbr.rel (0) target = $region13
    $region12: #{tpu_custom_call.1} parent=1 // pred_region
      %33 = vsyncadd [#allocation4], 0
      %s35 = sshll.u32 [#allocation5], 4
      %s36 = int_to_ptr.vmem [resolvable:$true] %s35
      %s37 = sshll.u32 %s1, 4
      %s38 = int_to_ptr.hbm [resolvable:$true] %s37
      %40 = dma.vmem_to_hbm [thread:$0]  %s36, 64, %s38, [#allocation4]
    $region13: #{tpu_custom_call.1} parent=1 // pred_fallthru
      _
    // Predicated region
    $region14: #{tpu_custom_call.1} parent=1 // pred_check
      _
    $region15: #{tpu_custom_call.1} parent=1 // pred_check_branch
      %42 = sbr.rel (0) target = $region17
    $region16: #{tpu_custom_call.1} parent=1 // pred_region
      %44 = dma.done [#allocation4], 64
    $region17: #{tpu_custom_call.1} parent=1 // pred_fallthru
      _
    %45 = vsyncpa [#allocation3], 1
    %46 = vsyncpa [#allocation4], 1

</llo_original>
